<compile_context>
chip_gen: v5e
topology: v5e:2x2
jax: 0.10.0
libtpu: 0.0.40
codegen_flags: <defaults>
</compile_context>

<pallas_src>
import functools

import jax
import jax.numpy as jnp
from jax import lax
from jax.experimental import pallas as pl
from jax.experimental.pallas import tpu as pltpu

N_BINS = 15
LANES = 128


def _ece_partial_kernel(logits_ref, labels_ref, acc_ref, *,
                        n_total, n_bins, nbp, tile_n, slab_n, bpc):
    """logits_ref: (C, tile_n) native dtype; labels_ref: (1, tile_n) int32;
    acc_ref: (3, nbp, 128) f32 resident accumulator for this core:
      row 0 = per-bin counts, row 1 = per-bin sum(conf), row 2 = per-bin
      sum(accuracy); the 128 lanes are independent partial-sum slots."""
    c = logits_ref.shape[0]

    @pl.when(pl.program_id(1) == 0)
    def _init():
        acc_ref[...] = jnp.zeros_like(acc_ref)

    # Exact reference bin boundaries: bin k = (k/n_bins, (k+1)/n_bins].
    # Padded rows (k >= n_bins) form a dummy bin that never matches (conf<=1<2).
    r = lax.broadcasted_iota(jnp.int32, (nbp, 1), 0).astype(jnp.float32)
    nb_f = float(n_bins)
    lowers = jnp.where(r < nb_f, r / nb_f, 2.0)          # (nbp, 1)
    uppers = jnp.where(r < nb_f, (r + 1.0) / nb_f, 2.0)  # (nbp, 1)

    # Nominal (unclamped) global column of this block's first sample.
    col_base = (pl.program_id(0) * bpc + pl.program_id(1)) * tile_n

    # Loop-invariant iotas hoisted out of the slab loop.
    ridx = lax.broadcasted_iota(jnp.int32, (c, slab_n), 0)        # class index
    lane = lax.broadcasted_iota(jnp.int32, (1, slab_n), 1)        # column index

    # Static slab loop: every temporary stays (c, slab_n)-sized.
    for s in range(tile_n // slab_n):
        start = s * slab_n
        x = logits_ref[:, start:start + slab_n].astype(jnp.float32)   # (C, S)
        lbl = labels_ref[:, start:start + slab_n]                      # (1, S)

        # confidence = max softmax prob = 1 / sum(exp(x - max)); exact divide.
        m = jnp.max(x, axis=0, keepdims=True)                          # (1, S)
        conf = 1.0 / jnp.sum(jnp.exp(x - m), axis=0, keepdims=True)    # (1, S)

        # prediction = FIRST index attaining the max (torch.max tie-break).
        pred = jnp.min(jnp.where(x == m, ridx, c), axis=0, keepdims=True)
        hit = (pred == lbl).astype(jnp.float32)                        # (1, S)

        # Column validity: handles the ragged tail (no input padding) and the
        # clamped fully-out-of-range block of the 2-way core split.
        col = col_base + start + lane
        valid = col < n_total                                          # (1, S)

        # Mask the payload with a select (NOT a multiply): garbage columns can
        # carry NaN/Inf conf and 0*NaN would still poison the accumulator.
        conf_m = jnp.where(valid, conf, 0.0)                           # (1, S)

        # Bin membership with bins on sublanes; invalid columns excluded.
        in_bin = ((conf > lowers) & (conf <= uppers) & valid
                  ).astype(jnp.float32)                                # (nbp, S)

        # Three weighted histograms; fold the S lanes into the 128 accumulator
        # lanes with static, vreg-aligned slices (no cross-lane movement).
        contribs = (in_bin,             # counts (validity already folded in)
                    in_bin * conf_m,    # sum of confidences
                    in_bin * hit)       # sum of accuracies (hit is clean 0/1)
        for j, contrib in enumerate(contribs):
            folded = contrib[:, 0:LANES]
            for g in range(1, slab_n // LANES):
                folded = folded + contrib[:, g * LANES:(g + 1) * LANES]
            acc_ref[j, :, :] += folded


def ece_loss(logits, labels, n_bins=N_BINS, tile_n=16384, slab_n=512):
    """Pallas ECE. logits: (N, C), labels: (N,) int. Returns shape (1,) f32."""
    n, c = logits.shape
    assert slab_n % LANES == 0 and tile_n % slab_n == 0 and tile_n >= slab_n
    nbp = ((n_bins + 7) // 8) * 8          # bins padded to a sublane multiple

    # Lane-dense layout: classes on sublanes, samples on lanes.  The transpose
    # is one extra HBM pass; still a large net win vs. the lane-sparse layout.
    logits_t = jnp.transpose(logits)                       # (C, N), native dtype
    labels2d = labels.astype(jnp.int32).reshape(1, n)      # free reshape

    # Cap the tile for small inputs; keep it a multiple of slab_n.
    tile = min(tile_n, ((n + slab_n - 1) // slab_n) * slab_n)
    n_blocks = pl.cdiv(n, tile)
    bpc = pl.cdiv(n_blocks, 2)   # 2-way megacore split (v7x); serial on 1-TC chips
    last_blk = n_blocks - 1

    # Clamp nominal block index so the trailing block of core 1 (when n_blocks
    # is odd) never DMAs out of range; its contribution is masked via `valid`.
    def col_map(ci, i):
        return (0, jnp.minimum(ci * bpc + i, last_blk))

    kernel = functools.partial(
        _ece_partial_kernel, n_total=n, n_bins=n_bins, nbp=nbp,
        tile_n=tile, slab_n=slab_n, bpc=bpc)

    # Corrected VMEM budget at tile_n=16384 (worst case, f32 logits):
    #   logits block : 16 sublanes (C padded) * 16384 * 4 B = 1.0 MiB  x2 buffers
    #   labels block :  8 sublanes            * 16384 * 4 B = 0.5 MiB  x2 buffers
    #   acc block    : 3*16*128*4 B ~ 24 KiB                 (x2)
    #   slab temporaries: O(100 KiB)
    # => ~3-4 MiB total; 32 MiB scoped limit leaves headroom on v5e/v6e/v7x.
    partials = pl.pallas_call(
        kernel,
        out_shape=jax.ShapeDtypeStruct((2, 3, nbp, LANES), jnp.float32),
        grid_spec=pltpu.PrefetchScalarGridSpec(
            num_scalar_prefetch=0,
            grid=(2, bpc),
            in_specs=[
                pl.BlockSpec((c, tile), col_map),
                pl.BlockSpec((1, tile), col_map),
            ],
            out_specs=pl.BlockSpec((None, 3, nbp, LANES),
                                   lambda ci, i: (ci, 0, 0, 0)),
        ),
        compiler_params=pltpu.CompilerParams(
            dimension_semantics=("parallel", "arbitrary"),
            vmem_limit_bytes=32 * 1024 * 1024),
    )(logits_t, labels2d)

    # Finalize: fold the two cores and the 128 partial-sum lanes, then the
    # 15-bin weighted |avg_conf - accuracy| in plain JAX (negligible).
    stats = jnp.sum(partials, axis=(0, 3))                 # (3, nbp)
    cnt = stats[0, :n_bins]
    csum = stats[1, :n_bins]
    asum = stats[2, :n_bins]
    nonempty = cnt > 0.0
    safe = jnp.where(nonempty, cnt, 1.0)
    prop = cnt / float(n)
    gap = jnp.abs(csum / safe - asum / safe)
    ece = jnp.sum(jnp.where(nonempty, gap * prop, 0.0))
    return ece.reshape(1)


def ece_ref(logits, labels, n_bins=N_BINS):
    """Pure-JAX reference mirroring the PyTorch forward."""
    sm = jax.nn.softmax(logits.astype(jnp.float32), axis=1)
    conf = jnp.max(sm, axis=1)
    pred = jnp.argmax(sm, axis=1)
    acc = (pred == labels).astype(jnp.float32)
    bounds = jnp.linspace(0.0, 1.0, n_bins + 1, dtype=jnp.float32)
    ece = jnp.zeros((1,), jnp.float32)
    n = conf.shape[0]
    for lo, hi in zip(bounds[:-1], bounds[1:]):
        in_bin = (conf > lo) & (conf <= hi)
        cnt = jnp.sum(in_bin.astype(jnp.float32))
        prop = cnt / n
        safe = jnp.maximum(cnt, 1.0)
        acc_in = jnp.sum(jnp.where(in_bin, acc, 0.0)) / safe
        conf_in = jnp.sum(jnp.where(in_bin, conf, 0.0)) / safe
        ece = ece + jnp.where(cnt > 0, jnp.abs(conf_in - acc_in) * prop, 0.0)
    return ece


if __name__ == "__main__":
    # ECELoss.__init__ has no learned parameters; the linspace(0,1,16) bin
    # boundaries (15 equal (lo,hi] bins) are generated inside the kernel.
    key = jax.random.PRNGKey(0)
    k_logits, k_labels = jax.random.split(key)

    N, C = 200, 10  # small: 200 samples (ragged vs. 128/512), 10 classes
    logits = jax.random.normal(k_logits, (N, C), dtype=jnp.float32) * 2.0
    labels = jax.random.randint(k_labels, (N,), 0, C, dtype=jnp.int32)

    out = ece_loss(logits, labels)
    jax.block_until_ready(out)

    ref = ece_ref(logits, labels)
    assert out.shape == (1,)
    assert jnp.allclose(out, ref, atol=1e-5), (out, ref)

    print("KERNEL_OK")
</pallas_src>

<mosaic_0001>
module attributes {stable_mosaic.version = 11 : i64} {
  func.func @_ece_partial_kernel(%arg0: i32, %arg1: i32, %arg2: memref<10x512xf32, #tpu.memory_space<vmem>>, %arg3: memref<1x512xi32, #tpu.memory_space<vmem>>, %arg4: memref<1x3x16x128xf32, #tpu.memory_space<vmem>>) attributes {dimension_semantics = [#tpu.dimension_semantics<parallel>, #tpu.dimension_semantics<arbitrary>], iteration_bounds = array<i64: 2, 1>, scalar_prefetch = 0 : i64, scratch_operands = 0 : i64, tpu.core_type = #tpu.core_type<tc>, window_params = [{transform_indices = @transform_0, window_bounds = array<i64: 10, 512>}, {transform_indices = @transform_1, window_bounds = array<i64: 1, 512>}, {transform_indices = @transform_2, window_bounds = array<i64: 1, 3, 16, 128>}]} {
    %c0_i32 = arith.constant 0 : i32
    %0 = arith.cmpi eq, %arg1, %c0_i32 : i32
    %1 = arith.extui %0 : i1 to i32
    %c0_i32_0 = arith.constant 0 : i32
    %2 = arith.cmpi ne, %1, %c0_i32_0 : i32
    scf.if %2 {
      %cst_38 = arith.constant 0.000000e+00 : f32
      %105 = vector.broadcast %cst_38 : f32 to vector<3x16x128xf32>
      %c0_39 = arith.constant 0 : index
      %c0_40 = arith.constant 0 : index
      %c0_41 = arith.constant 0 : index
      %c0_42 = arith.constant 0 : index
      %106 = vector.load %arg4[%c0_39, %c0_40, %c0_41, %c0_42] : memref<1x3x16x128xf32, #tpu.memory_space<vmem>>, vector<1x3x16x128xf32>
      %107 = vector.shape_cast %106 : vector<1x3x16x128xf32> to vector<3x16x128xf32>
      %108 = vector.shape_cast %105 : vector<3x16x128xf32> to vector<1x3x16x128xf32>
      tpu.vector_store %arg4[%c0_39, %c0_40, %c0_41, %c0_42], %108 {strides = array<i32>} : memref<1x3x16x128xf32, #tpu.memory_space<vmem>>, vector<1x3x16x128xf32>,
    } else {
    }
    %3 = tpu.iota {dimensions = array<i32: 0>} : vector<16x1xi32>
    %4 = arith.sitofp %3 : vector<16x1xi32> to vector<16x1xf32>
    %cst = arith.constant 1.500000e+01 : f32
    %5 = vector.broadcast %cst : f32 to vector<16x1xf32>
    %6 = arith.cmpf olt, %4, %5 : vector<16x1xf32>
    %cst_1 = arith.constant 1.500000e+01 : f32
    %7 = vector.broadcast %cst_1 : f32 to vector<16x1xf32>
    %8 = arith.divf %4, %7 : vector<16x1xf32>
    %cst_2 = arith.constant 2.000000e+00 : f32
    %9 = vector.broadcast %cst_2 : f32 to vector<16x1xf32>
    %10 = arith.select %6, %8, %9 : vector<16x1xi1>, vector<16x1xf32>
    %cst_3 = arith.constant 1.500000e+01 : f32
    %11 = vector.broadcast %cst_3 : f32 to vector<16x1xf32>
    %12 = arith.cmpf olt, %4, %11 : vector<16x1xf32>
    %cst_4 = arith.constant 1.000000e+00 : f32
    %13 = vector.broadcast %cst_4 : f32 to vector<16x1xf32>
    %14 = arith.addf %4, %13 : vector<16x1xf32>
    %cst_5 = arith.constant 1.500000e+01 : f32
    %15 = vector.broadcast %cst_5 : f32 to vector<16x1xf32>
    %16 = arith.divf %14, %15 : vector<16x1xf32>
    %cst_6 = arith.constant 2.000000e+00 : f32
    %17 = vector.broadcast %cst_6 : f32 to vector<16x1xf32>
    %18 = arith.select %12, %16, %17 : vector<16x1xi1>, vector<16x1xf32>
    %c1_i32 = arith.constant 1 : i32
    %19 = arith.muli %arg0, %c1_i32 : i32
    %20 = arith.addi %19, %arg1 : i32
    %c512_i32 = arith.constant 512 : i32
    %21 = arith.muli %20, %c512_i32 : i32
    %22 = tpu.iota {dimensions = array<i32: 0>} : vector<10x512xi32>
    %23 = tpu.iota {dimensions = array<i32: 1>} : vector<1x512xi32>
    %c0 = arith.constant 0 : index
    %c0_7 = arith.constant 0 : index
    %24 = vector.load %arg2[%c0, %c0_7] : memref<10x512xf32, #tpu.memory_space<vmem>>, vector<10x512xf32>
    %c0_8 = arith.constant 0 : index
    %c0_9 = arith.constant 0 : index
    %25 = vector.load %arg3[%c0_8, %c0_9] : memref<1x512xi32, #tpu.memory_space<vmem>>, vector<1x512xi32>
    %cst_10 = arith.constant dense<0xFF800000> : vector<512xf32>
    %26 = vector.multi_reduction <maximumf>, %24, %cst_10 [0] : vector<10x512xf32> to vector<512xf32>
    %27 = vector.shape_cast %26 : vector<512xf32> to vector<1x512xf32>
    %28 = vector.broadcast %27 : vector<1x512xf32> to vector<10x512xf32>
    %29 = arith.subf %24, %28 : vector<10x512xf32>
    %30 = math.exp %29 : vector<10x512xf32>
    %cst_11 = arith.constant dense<0.000000e+00> : vector<512xf32>
    %31 = vector.multi_reduction <add>, %30, %cst_11 [0] : vector<10x512xf32> to vector<512xf32>
    %32 = vector.shape_cast %31 : vector<512xf32> to vector<1x512xf32>
    %cst_12 = arith.constant 1.000000e+00 : f32
    %33 = vector.broadcast %cst_12 : f32 to vector<1x512xf32>
    %34 = arith.divf %33, %32 : vector<1x512xf32>
    %35 = vector.broadcast %27 : vector<1x512xf32> to vector<10x512xf32>
    %36 = arith.cmpf oeq, %24, %35 : vector<10x512xf32>
    %c10_i32 = arith.constant 10 : i32
    %37 = vector.broadcast %c10_i32 : i32 to vector<10x512xi32>
    %38 = arith.select %36, %22, %37 : vector<10x512xi1>, vector<10x512xi32>
    %cst_13 = arith.constant dense<2147483647> : vector<512xi32>
    %39 = vector.multi_reduction <minsi>, %38, %cst_13 [0] : vector<10x512xi32> to vector<512xi32>
    %40 = vector.shape_cast %39 : vector<512xi32> to vector<1x512xi32>
    %41 = arith.cmpi eq, %40, %25 : vector<1x512xi32>
    %42 = arith.extui %41 : vector<1x512xi1> to vector<1x512xi32>
    %43 = arith.sitofp %42 : vector<1x512xi32> to vector<1x512xf32>
    %c0_i32_14 = arith.constant 0 : i32
    %44 = arith.addi %21, %c0_i32_14 : i32
    %45 = vector.broadcast %44 : i32 to vector<1x512xi32>
    %46 = arith.addi %45, %23 : vector<1x512xi32>
    %c200_i32 = arith.constant 200 : i32
    %47 = vector.broadcast %c200_i32 : i32 to vector<1x512xi32>
    %48 = arith.cmpi slt, %46, %47 : vector<1x512xi32>
    %cst_15 = arith.constant 0.000000e+00 : f32
    %49 = vector.broadcast %cst_15 : f32 to vector<1x512xf32>
    %50 = arith.select %48, %34, %49 : vector<1x512xi1>, vector<1x512xf32>
    %51 = vector.broadcast %34 : vector<1x512xf32> to vector<16x512xf32>
    %52 = vector.broadcast %10 : vector<16x1xf32> to vector<16x512xf32>
    %53 = arith.cmpf ogt, %51, %52 : vector<16x512xf32>
    %54 = vector.broadcast %34 : vector<1x512xf32> to vector<16x512xf32>
    %55 = vector.broadcast %18 : vector<16x1xf32> to vector<16x512xf32>
    %56 = arith.cmpf ole, %54, %55 : vector<16x512xf32>
    %57 = arith.andi %53, %56 : vector<16x512xi1>
    %58 = vector.broadcast %48 : vector<1x512xi1> to vector<16x512xi1>
    %59 = arith.andi %57, %58 : vector<16x512xi1>
    %60 = arith.extui %59 : vector<16x512xi1> to vector<16x512xi32>
    %61 = arith.sitofp %60 : vector<16x512xi32> to vector<16x512xf32>
    %62 = vector.broadcast %50 : vector<1x512xf32> to vector<16x512xf32>
    %63 = arith.mulf %61, %62 : vector<16x512xf32>
    %64 = vector.broadcast %43 : vector<1x512xf32> to vector<16x512xf32>
    %65 = arith.mulf %61, %64 : vector<16x512xf32>
    %66 = vector.extract_strided_slice %61 {offsets = [0, 0], sizes = [16, 128], strides = [1, 1]} : vector<16x512xf32> to vector<16x128xf32>
    %67 = vector.extract_strided_slice %61 {offsets = [0, 128], sizes = [16, 128], strides = [1, 1]} : vector<16x512xf32> to vector<16x128xf32>
    %68 = arith.addf %66, %67 : vector<16x128xf32>
    %69 = vector.extract_strided_slice %61 {offsets = [0, 256], sizes = [16, 128], strides = [1, 1]} : vector<16x512xf32> to vector<16x128xf32>
    %70 = arith.addf %68, %69 : vector<16x128xf32>
    %71 = vector.extract_strided_slice %61 {offsets = [0, 384], sizes = [16, 128], strides = [1, 1]} : vector<16x512xf32> to vector<16x128xf32>
    %72 = arith.addf %70, %71 : vector<16x128xf32>
    %c0_16 = arith.constant 0 : index
    %c0_17 = arith.constant 0 : index
    %c0_18 = arith.constant 0 : index
    %c0_19 = arith.constant 0 : index
    %73 = vector.load %arg4[%c0_16, %c0_17, %c0_18, %c0_19] : memref<1x3x16x128xf32, #tpu.memory_space<vmem>>, vector<1x1x16x128xf32>
    %74 = vector.shape_cast %73 : vector<1x1x16x128xf32> to vector<16x128xf32>
    %75 = arith.addf %74, %72 : vector<16x128xf32>
    %c0_20 = arith.constant 0 : index
    %c0_21 = arith.constant 0 : index
    %c0_22 = arith.constant 0 : index
    %c0_23 = arith.constant 0 : index
    %76 = vector.load %arg4[%c0_20, %c0_21, %c0_22, %c0_23] : memref<1x3x16x128xf32, #tpu.memory_space<vmem>>, vector<1x1x16x128xf32>
    %77 = vector.shape_cast %76 : vector<1x1x16x128xf32> to vector<16x128xf32>
    %78 = vector.shape_cast %75 : vector<16x128xf32> to vector<1x1x16x128xf32>
    tpu.vector_store %arg4[%c0_20, %c0_21, %c0_22, %c0_23], %78 {strides = array<i32>} : memref<1x3x16x128xf32, #tpu.memory_space<vmem>>, vector<1x1x16x128xf32>,
    %79 = vector.extract_strided_slice %63 {offsets = [0, 0], sizes = [16, 128], strides = [1, 1]} : vector<16x512xf32> to vector<16x128xf32>
    %80 = vector.extract_strided_slice %63 {offsets = [0, 128], sizes = [16, 128], strides = [1, 1]} : vector<16x512xf32> to vector<16x128xf32>
    %81 = arith.addf %79, %80 : vector<16x128xf32>
    %82 = vector.extract_strided_slice %63 {offsets = [0, 256], sizes = [16, 128], strides = [1, 1]} : vector<16x512xf32> to vector<16x128xf32>
    %83 = arith.addf %81, %82 : vector<16x128xf32>
    %84 = vector.extract_strided_slice %63 {offsets = [0, 384], sizes = [16, 128], strides = [1, 1]} : vector<16x512xf32> to vector<16x128xf32>
    %85 = arith.addf %83, %84 : vector<16x128xf32>
    %c0_24 = arith.constant 0 : index
    %c1 = arith.constant 1 : index
    %c0_25 = arith.constant 0 : index
    %c0_26 = arith.constant 0 : index
    %86 = vector.load %arg4[%c0_24, %c1, %c0_25, %c0_26] : memref<1x3x16x128xf32, #tpu.memory_space<vmem>>, vector<1x1x16x128xf32>
    %87 = vector.shape_cast %86 : vector<1x1x16x128xf32> to vector<16x128xf32>
    %88 = arith.addf %87, %85 : vector<16x128xf32>
    %c0_27 = arith.constant 0 : index
    %c1_28 = arith.constant 1 : index
    %c0_29 = arith.constant 0 : index
    %c0_30 = arith.constant 0 : index
    %89 = vector.load %arg4[%c0_27, %c1_28, %c0_29, %c0_30] : memref<1x3x16x128xf32, #tpu.memory_space<vmem>>, vector<1x1x16x128xf32>
    %90 = vector.shape_cast %89 : vector<1x1x16x128xf32> to vector<16x128xf32>
    %91 = vector.shape_cast %88 : vector<16x128xf32> to vector<1x1x16x128xf32>
    tpu.vector_store %arg4[%c0_27, %c1_28, %c0_29, %c0_30], %91 {strides = array<i32>} : memref<1x3x16x128xf32, #tpu.memory_space<vmem>>, vector<1x1x16x128xf32>,
    %92 = vector.extract_strided_slice %65 {offsets = [0, 0], sizes = [16, 128], strides = [1, 1]} : vector<16x512xf32> to vector<16x128xf32>
    %93 = vector.extract_strided_slice %65 {offsets = [0, 128], sizes = [16, 128], strides = [1, 1]} : vector<16x512xf32> to vector<16x128xf32>
    %94 = arith.addf %92, %93 : vector<16x128xf32>
    %95 = vector.extract_strided_slice %65 {offsets = [0, 256], sizes = [16, 128], strides = [1, 1]} : vector<16x512xf32> to vector<16x128xf32>
    %96 = arith.addf %94, %95 : vector<16x128xf32>
    %97 = vector.extract_strided_slice %65 {offsets = [0, 384], sizes = [16, 128], strides = [1, 1]} : vector<16x512xf32> to vector<16x128xf32>
    %98 = arith.addf %96, %97 : vector<16x128xf32>
    %c0_31 = arith.constant 0 : index
    %c2 = arith.constant 2 : index
    %c0_32 = arith.constant 0 : index
    %c0_33 = arith.constant 0 : index
    %99 = vector.load %arg4[%c0_31, %c2, %c0_32, %c0_33] : memref<1x3x16x128xf32, #tpu.memory_space<vmem>>, vector<1x1x16x128xf32>
    %100 = vector.shape_cast %99 : vector<1x1x16x128xf32> to vector<16x128xf32>
    %101 = arith.addf %100, %98 : vector<16x128xf32>
    %c0_34 = arith.constant 0 : index
    %c2_35 = arith.constant 2 : index
    %c0_36 = arith.constant 0 : index
    %c0_37 = arith.constant 0 : index
    %102 = vector.load %arg4[%c0_34, %c2_35, %c0_36, %c0_37] : memref<1x3x16x128xf32, #tpu.memory_space<vmem>>, vector<1x1x16x128xf32>
    %103 = vector.shape_cast %102 : vector<1x1x16x128xf32> to vector<16x128xf32>
    %104 = vector.shape_cast %101 : vector<16x128xf32> to vector<1x1x16x128xf32>
    tpu.vector_store %arg4[%c0_34, %c2_35, %c0_36, %c0_37], %104 {strides = array<i32>} : memref<1x3x16x128xf32, #tpu.memory_space<vmem>>, vector<1x1x16x128xf32>,
    return
  }
  func.func @transform_0(%arg0: i32, %arg1: i32) -> (i32, i32) {
    %c1_i32 = arith.constant 1 : i32
    %0 = arith.muli %arg0, %c1_i32 : i32
    %1 = arith.addi %0, %arg1 : i32
    %c0_i32 = arith.constant 0 : i32
    %2 = arith.minsi %1, %c0_i32 : i32
    %c0_i32_0 = arith.constant 0 : i32
    %c0_i32_1 = arith.constant 0 : i32
    return %c0_i32_0, %2 : i32, i32
  }
  func.func @transform_1(%arg0: i32, %arg1: i32) -> (i32, i32) {
    %c1_i32 = arith.constant 1 : i32
    %0 = arith.muli %arg0, %c1_i32 : i32
    %1 = arith.addi %0, %arg1 : i32
    %c0_i32 = arith.constant 0 : i32
    %2 = arith.minsi %1, %c0_i32 : i32
    %c0_i32_0 = arith.constant 0 : i32
    %c0_i32_1 = arith.constant 0 : i32
    return %c0_i32_0, %2 : i32, i32
  }
  func.func @transform_2(%arg0: i32, %arg1: i32) -> (i32, i32, i32, i32) {
    %c0_i32 = arith.constant 0 : i32
    %c0_i32_0 = arith.constant 0 : i32
    %c0_i32_1 = arith.constant 0 : i32
    %c0_i32_2 = arith.constant 0 : i32
    return %arg0, %c0_i32, %c0_i32_0, %c0_i32_1 : i32, i32, i32, i32
  }
}

</mosaic_0001>

<llo_original>
// kernel: tpu_custom_call.1
$region0: #{tpu_custom_call.1}
  #allocation0 [shape = 'u32[]', space=smem, size = 0x4, offset = 0x4, fixed_abs, tag = 'smem constant byte address 0x4 - core index']
  #allocation1 [shape = 'u32[72,128]{1,0:T(1,128)}', space=vmem, size = 0x9000, scoped, tag = 'internal scratch']
  %s0 = inlined_call_operand.hbm [shape: f32[10,200], index: 0, kind: input, shape index: {}]
  %s1 = inlined_call_operand.hbm [shape: s32[1,200], index: 1, kind: input, shape index: {}]
  %s2 = inlined_call_operand.hbm [shape: f32[2,3,16,128], index: 2, kind: output, shape index: {}]
  %s3 = sld [smem:[#allocation0]]
  $region53: #{tpu_custom_call.1} parent=0
    _
  %s5 = ssub.s32 1, %s3
  %s6 = scalar_select 0, %s5, %s3
  $region1: #{tpu_custom_call.1} parent=0
    #allocation2 [shape = 'u8[65536]{0}', space=vmem, size = 0x10000, scoped, tag = 'input window, operand 0']
    #allocation3 [shape = 's32[2]{0}', space=sflag, size = 0x8, scoped, tag = 'scoped memory for tpu_custom_call.1']
    #allocation4 [shape = 's32[2]{0}', space=sflag, size = 0x8, scoped, tag = 'scoped memory for tpu_custom_call.1']
    #allocation5 [shape = 'u8[4096]{0}', space=vmem, size = 0x1000, scoped, tag = 'input window, operand 1']
    #allocation6 [shape = 's32[2]{0}', space=sflag, size = 0x8, scoped, tag = 'scoped memory for tpu_custom_call.1']
    #allocation7 [shape = 'u8[49152]{0}', space=vmem, size = 0xc000, scoped, tag = 'output window, operand 0']
    %7 = vsyncpa [#allocation3], 0
    %s8 = scalar_lea.sflag [#allocation3], 1
    %9 = vsyncpa %s8, 0
    %10 = vsyncpa [#allocation6], 0
    %s11 = scalar_lea.sflag [#allocation6], 1
    %12 = vsyncpa %s11, 0
    %13 = vsyncpa [#allocation4], 0
    %s14 = scalar_lea.sflag [#allocation4], 1
    %15 = vsyncpa %s14, 0
    loop: start=0, step=1, limit=4
    $region2: #{tpu_custom_call.1} parent=1 // loop_pre_header
      _
    $region3: #{tpu_custom_call.1} parent=1 // loop_header
      %s17 = sphi 0, %s21
      %p18 = scmp.ge.s32.totalorder %s17, 4
      %s24 = sphi 0, %s36
      %s25 = sphi 0, %s32
      %s26 = sphi 0, %s24
      %s27 = sphi 0, %s25
      %s28 = sphi 0, %s26
      %s29 = sphi 0, %s27
      %s45 = sphi 0, %s47
      %s48 = sphi 0, %s45
      %s49 = sphi 0, %s48
      %s65 = sphi 0, %s49
      %s77 = sphi 0, %s79
      %s80 = sphi 0, %s77
      %s81 = sphi 0, %s80
      %s97 = sphi 0, %s81
      %s103 = sphi 0, %s105
      %s106 = sphi 0, %s103
      %s107 = sphi 0, %s106
      %s123 = sphi 0, %s107
    $region4: #{tpu_custom_call.1} parent=1 // loop_header_branch
      %20 = sbr.rel (%p18) target = $region8
    $region5: #{tpu_custom_call.1} parent=1 // loop_body
      %s22 = ssub.s32 %s17, 1
      %s23 = ssub.s32 %s17, 2
      %s30 = sadd.s32 1, %s25
      %p31 = scmp.ge.s32.totalorder %s30, 1
      %s32 = scalar_select %p31, 0, %s30
      %s33 = sadd.s32 1, %s24
      %s34 = scalar_select %p31, %s33, %s24
      %p35 = scmp.ge.s32.totalorder %s34, 2
      %s36 = scalar_select %p35, 0, %s34
      %s37 = sadd.s32 %s24, %s25
      %p38 = scmp.lt.s32.totalorder %s37, 0
      %s39 = scalar_select %p38, %s37, 0
      %s40 = sadd.s32 %s36, %s32
      %p41 = scmp.lt.s32.totalorder %s40, 0
      %s42 = scalar_select %p41, %s40, 0
      %s43 = ssub.s32 %s39, %s42
      %p44 = scmp.eq.s32.totalorder %s43, 0
      %s46 = sadd.s32 %s45, 1
      %s47 = scalar_select %p44, %s45, %s46
      %p50 = pneg %p44
      %p51 = scmp.eq.s32.totalorder %s17, 1
      %p52 = por %p50, %p51
      %p53 = scmp.ne.s32.totalorder %s45, %s48
      %p54 = scmp.eq.s32.totalorder %s17, 0
      %p55 = por %p53, %p54
      %p56 = scmp.ne.s32.totalorder %s45, %s48
      %p57 = scmp.eq.s32.totalorder %s22, 1
      %p58 = por %p56, %p57
      %p59 = scmp.ne.s32.totalorder %s48, %s49
      %p60 = scmp.eq.s32.totalorder %s22, 0
      %p61 = por %p59, %p60
      %p62 = scmp.ne.s32.totalorder %s48, %s49
      %p63 = scmp.eq.s32.totalorder %s23, 1
      %p64 = por %p62, %p63
      %p66 = scmp.ne.s32.totalorder %s49, %s65
      %p67 = scmp.eq.s32.totalorder %s23, 0
      %p68 = por %p66, %p67
      %s69 = sadd.s32 %s24, %s25
      %p70 = scmp.lt.s32.totalorder %s69, 0
      %s71 = scalar_select %p70, %s69, 0
      %s72 = sadd.s32 %s36, %s32
      %p73 = scmp.lt.s32.totalorder %s72, 0
      %s74 = scalar_select %p73, %s72, 0
      %s75 = ssub.s32 %s71, %s74
      %p76 = scmp.eq.s32.totalorder %s75, 0
      %s78 = sadd.s32 %s77, 1
      %s79 = scalar_select %p76, %s77, %s78
      %p82 = pneg %p76
      %p83 = scmp.eq.s32.totalorder %s17, 1
      %p84 = por %p82, %p83
      %p85 = scmp.ne.s32.totalorder %s77, %s80
      %p86 = scmp.eq.s32.totalorder %s17, 0
      %p87 = por %p85, %p86
      %p88 = scmp.ne.s32.totalorder %s77, %s80
      %p89 = scmp.eq.s32.totalorder %s22, 1
      %p90 = por %p88, %p89
      %p91 = scmp.ne.s32.totalorder %s80, %s81
      %p92 = scmp.eq.s32.totalorder %s22, 0
      %p93 = por %p91, %p92
      %p94 = scmp.ne.s32.totalorder %s80, %s81
      %p95 = scmp.eq.s32.totalorder %s23, 1
      %p96 = por %p94, %p95
      %p98 = scmp.ne.s32.totalorder %s81, %s97
      %p99 = scmp.eq.s32.totalorder %s23, 0
      %p100 = por %p98, %p99
      %s101 = ssub.s32 %s24, %s36
      %p102 = scmp.eq.s32.totalorder %s101, 0
      %s104 = sadd.s32 %s103, 1
      %s105 = scalar_select %p102, %s103, %s104
      %p108 = pneg %p102
      %p109 = scmp.eq.s32.totalorder %s17, 1
      %p110 = por %p108, %p109
      %p111 = scmp.ne.s32.totalorder %s103, %s106
      %p112 = scmp.eq.s32.totalorder %s17, 0
      %p113 = por %p111, %p112
      %p114 = scmp.ne.s32.totalorder %s103, %s106
      %p115 = scmp.eq.s32.totalorder %s22, 1
      %p116 = por %p114, %p115
      %p117 = scmp.ne.s32.totalorder %s106, %s107
      %p118 = scmp.eq.s32.totalorder %s22, 0
      %p119 = por %p117, %p118
      %p120 = scmp.ne.s32.totalorder %s106, %s107
      %p121 = scmp.eq.s32.totalorder %s23, 1
      %p122 = por %p120, %p121
      %p124 = scmp.ne.s32.totalorder %s107, %s123
      %p125 = scmp.eq.s32.totalorder %s23, 0
      %p126 = por %p124, %p125
      %p127 = scmp.le.s32.totalorder 1, %s17
      %p128 = scmp.lt.s32.totalorder %s17, 3
      %p129 = pnand %p127, %p128
      %p130 = pneg %p129
      // Predicated region
      $region9: #{tpu_custom_call.1} parent=5 // pred_check
        _
      $region10: #{tpu_custom_call.1} parent=5 // pred_check_branch
        %132 = sbr.rel (%p129) target = $region12
      $region11: #{tpu_custom_call.1} parent=5 // pred_region
        %s133 = ssub.s32 %s17, 1
      $region12: #{tpu_custom_call.1} parent=5 // pred_fallthru
        _
      %p134 = scmp.lt.s32.totalorder %s17, 2
      // Predicated region
      $region13: #{tpu_custom_call.1} parent=5 // pred_check
        %p135 = pneg %p134
      $region14: #{tpu_custom_call.1} parent=5 // pred_check_branch
        %137 = sbr.rel (%p135) target = $region16
      $region15: #{tpu_custom_call.1} parent=5 // pred_region
        // Predicated region
        $region17: #{tpu_custom_call.1} parent=15 // pred_check
          %p138 = pneg %p55
        $region18: #{tpu_custom_call.1} parent=15 // pred_check_branch
          %140 = sbr.rel (%p138) target = $region20
        $region19: #{tpu_custom_call.1} parent=15 // pred_region
          %s141 = sand.u32 %s45, 1
          %s142 = scalar_lea.sflag [#allocation3], %s141
          %s143 = sand.u32 %s45, 1
          %s144 = smul.addr %s143, 64
          %s145 = scalar_lea.vmem [#allocation2], %s144
          %s146 = sadd.s32 %s24, %s25
          %p147 = scmp.lt.s32.totalorder %s146, 0
          %s148 = scalar_select %p147, %s146, 0
          %s149 = smul.u32 4, %s148
          %s150 = ssub.s32 2, %s149
          %s151 = smul.u32 16, %s150
          %s152 = ssub.s32 64, %s151
          %s153 = sshll.u32 %s152, 4
          %154 = vsyncadd %s142, %s153
          %p155 = scmp.ne.s32.totalorder 0, %s151
          %s156 = smul.addr %s149, 8
          %s157 = scalar_lea.hbm %s0, %s156
          %s158 = smul.u32 %s150, 8
          %s159 = smul.u32 %s158, 2
          %s160 = sshll.u32 %s157, 4
          %s161 = int_to_ptr.hbm [resolvable:$true] %s160
          %s162 = sshll.u32 %s145, 4
          %s163 = int_to_ptr.vmem [resolvable:$true] %s162
          %s164 = sshll.u32 %s159, 4
          %168 = dma.hbm_to_vmem [thread:$0]  (%p155), %s161, %s164, %s163, %s142, 256, 512, %s158
        $region20: #{tpu_custom_call.1} parent=15 // pred_fallthru
          _
        // Predicated region
        $region21: #{tpu_custom_call.1} parent=15 // pred_check
          %p169 = pneg %p87
        $region22: #{tpu_custom_call.1} parent=15 // pred_check_branch
          %171 = sbr.rel (%p169) target = $region24
        $region23: #{tpu_custom_call.1} parent=15 // pred_region
          %s172 = sand.u32 %s77, 1
          %s173 = scalar_lea.sflag [#allocation6], %s172
          %s174 = sand.u32 %s77, 1
          %s175 = smul.addr %s174, 4
          %s176 = scalar_lea.vmem [#allocation5], %s175
          %s177 = sadd.s32 %s24, %s25
          %p178 = scmp.lt.s32.totalorder %s177, 0
          %s179 = scalar_select %p178, %s177, 0
          %s180 = smul.u32 4, %s179
          %s181 = ssub.s32 2, %s180
          %s182 = ssub.s32 4, %s181
          %s183 = sshll.u32 %s182, 4
          %184 = vsyncadd %s173, %s183
          %p185 = scmp.ne.s32.totalorder 0, %s181
          %s186 = scalar_lea.hbm %s1, %s180
          %s187 = sshll.u32 %s181, 4
          %s188 = sshll.u32 %s186, 4
          %s189 = int_to_ptr.hbm [resolvable:$true] %s188
          %s190 = sshll.u32 %s176, 4
          %s191 = int_to_ptr.vmem [resolvable:$true] %s190
          %193 = dma.hbm_to_vmem [thread:$0]  (%p185), %s189, %s187, %s191, %s173
        $region24: #{tpu_custom_call.1} parent=15 // pred_fallthru
          _
      $region16: #{tpu_custom_call.1} parent=5 // pred_fallthru
        _
      %p194 = scmp.le.s32.totalorder 1, %s17
      %p195 = scmp.lt.s32.totalorder %s17, 3
      %p196 = pnand %p194, %p195
      %p197 = pneg %p196
      // Predicated region
      $region25: #{tpu_custom_call.1} parent=5 // pred_check
        _
      $region26: #{tpu_custom_call.1} parent=5 // pred_check_branch
        %199 = sbr.rel (%p196) target = $region28
      $region27: #{tpu_custom_call.1} parent=5 // pred_region
        %s200 = ssub.s32 %s17, 1
        %s201 = sand.u32 %s48, 1
        %s202 = scalar_lea.sflag [#allocation3], %s201
        %s203 = sand.u32 %s48, 1
        %s204 = smul.addr %s203, 64
        %s205 = scalar_lea.vmem [#allocation2], %s204
        // Predicated region
        $region29: #{tpu_custom_call.1} parent=27 // pred_check
          %p206 = pneg %p61
        $region30: #{tpu_custom_call.1} parent=27 // pred_check_branch
          %208 = sbr.rel (%p206) target = $region32
        $region31: #{tpu_custom_call.1} parent=27 // pred_region
          %210 = dma.done %s202, 1024
        $region32: #{tpu_custom_call.1} parent=27 // pred_fallthru
          _
        %s211 = sand.u32 %s80, 1
        %s212 = scalar_lea.sflag [#allocation6], %s211
        %s213 = sand.u32 %s80, 1
        %s214 = smul.addr %s213, 4
        %s215 = scalar_lea.vmem [#allocation5], %s214
        // Predicated region
        $region33: #{tpu_custom_call.1} parent=27 // pred_check
          %p216 = pneg %p93
        $region34: #{tpu_custom_call.1} parent=27 // pred_check_branch
          %218 = sbr.rel (%p216) target = $region36
        $region35: #{tpu_custom_call.1} parent=27 // pred_region
          %220 = dma.done %s212, 64
        $region36: #{tpu_custom_call.1} parent=27 // pred_fallthru
          _
        %s221 = sand.u32 %s48, 1
        %s222 = scalar_lea.sflag [#allocation3], %s221
        %s223 = sand.u32 %s48, 1
        %s224 = smul.addr %s223, 64
        %s225 = scalar_lea.vmem [#allocation2], %s224
        %p226 = pneg %p61
        %p227 = pneg %p58
        %s228 = sand.u32 %s80, 1
        %s229 = scalar_lea.sflag [#allocation6], %s228
        %s230 = sand.u32 %s80, 1
        %s231 = smul.addr %s230, 4
        %s232 = scalar_lea.vmem [#allocation5], %s231
        %p233 = pneg %p93
        %p234 = pneg %p90
        %p235 = pneg %p119
        %p236 = pneg %p116
        %s237 = sand.u32 %s106, 1
        %s238 = scalar_lea.sflag [#allocation4], %s237
        %s239 = sand.u32 %s106, 1
        %s240 = smul.addr %s239, 48
        %s241 = scalar_lea.vmem [#allocation7], %s240
        %s242 = sadd.s32 %s26, %s27
        %p243 = scmp.lt.s32.totalorder %s242, 0
        %s244 = scalar_select %p243, %s242, 0
        %s245 = smul.u32 4, %s244
        %s246 = ssub.s32 2, %s245
        %s247 = smul.u32 16, %s246
        %s248 = sadd.s32 %s26, %s27
        %p249 = scmp.lt.s32.totalorder %s248, 0
        %s250 = scalar_select %p249, %s248, 0
        %s251 = smul.u32 4, %s250
        %s252 = ssub.s32 2, %s251
        %p253 = scmp.eq.s32.totalorder %s27, 0
        // Predicated region
        $region37: #{tpu_custom_call.1} parent=27 // pred_check
          %p254 = pneg %p253
        $region38: #{tpu_custom_call.1} parent=27 // pred_check_branch
          %256 = sbr.rel (%p254) target = $region40
        $region39: #{tpu_custom_call.1} parent=27 // pred_region
          %257 = vst [vmem:[%s241] sm:$0xff] 0.0
          %258 = vst [vmem:[%s241 + $0x8] sm:$0xff] 0.0
          %259 = vst [vmem:[%s241 + $0x10] sm:$0xff] 0.0
          %260 = vst [vmem:[%s241 + $0x18] sm:$0xff] 0.0
          %261 = vst [vmem:[%s241 + $0x20] sm:$0xff] 0.0
          %262 = vst [vmem:[%s241 + $0x28] sm:$0xff] 0.0
        $region40: #{tpu_custom_call.1} parent=27 // pred_fallthru
          _
        %v263 = vlaneseq
        %v264 = vshrl.u32 %v263, 7
        %v265 = vadd.s32 %v264, 8
        %v266 = vcvt.s32.f32 %v264
        %v267 = vcvt.s32.f32 %v265
        %vm268 = vcmp.lt.f32.partialorder %v266, 15.0
        %vm269 = vcmp.lt.f32.partialorder %v267, 15.0
        %v270 = vrcp.pop 15.0
        %v271 = vmul.f32 15.0, %v270
        %v272 = vsub.f32 1.0, %v271
        %v273 = vmul.f32 %v270, %v272
        %v274 = vadd.f32 %v270, %v273
        %vm275 = vweird.f32 %v270
        %v276 = vsel %vm275, %v270, %v274
        %v277 = vmul.f32 %v266, %v276
        %v278 = vmul.f32 %v267, %v276
        %v279 = vsel %vm268, %v277, 2.0
        %v280 = vsel %vm269, %v278, 2.0
        %v281 = vadd.f32 %v266, 1.0
        %v282 = vadd.f32 %v267, 1.0
        %v283 = vmul.f32 %v281, %v276
        %v284 = vmul.f32 %v282, %v276
        %v285 = vsel %vm268, %v283, 2.0
        %v286 = vsel %vm269, %v284, 2.0
        %s287 = sadd.s32 %s26, %s27
        %s288 = smul.u32 %s287, 512
        %v289 = vlaneseq
        %v290 = vand.u32 %v289, 127
        %v291 = vadd.s32 %v290, 128
        %v292 = vadd.s32 %v290, 256
        %v293 = vadd.s32 %v290, 384
        %v294 = vld [vmem:[%s205] sm:$0xff]
        %v295 = vld [vmem:[%s205 + $0x8] sm:$0xff]
        %v296 = vld [vmem:[%s205 + $0x10] sm:$0xff]
        %v297 = vld [vmem:[%s205 + $0x18] sm:$0xff]
        %v298 = vld [vmem:[%s205 + $0x20] sm:$0x3]
        %v299 = vld [vmem:[%s205 + $0x28] sm:$0x3]
        %v300 = vld [vmem:[%s205 + $0x30] sm:$0x3]
        %v301 = vld [vmem:[%s205 + $0x38] sm:$0x3]
        %v302 = vld [vmem:[%s215] sm:$0xf]
        %vm303 = vcmask 1041408
        %v304 = vsel %vm303, %v298, -inf
        %v305 = vmax.f32 %v294, %v304
        %v306 = vrot.slane %v305, 4
        %v307 = vmax.f32 %v305, %v306
        %v308 = vrot.slane %v307, 2
        %v309 = vmax.f32 %v307, %v308
        %v310 = vrot.slane %v309, 1
        %v311 = vmax.f32 %v309, %v310
        %v312 = vsel %vm303, %v299, -inf
        %v313 = vmax.f32 %v295, %v312
        %v314 = vrot.slane %v313, 4
        %v315 = vmax.f32 %v313, %v314
        %v316 = vrot.slane %v315, 2
        %v317 = vmax.f32 %v315, %v316
        %v318 = vrot.slane %v317, 1
        %v319 = vmax.f32 %v317, %v318
        %v320 = vsel %vm303, %v300, -inf
        %v321 = vmax.f32 %v296, %v320
        %v322 = vrot.slane %v321, 4
        %v323 = vmax.f32 %v321, %v322
        %v324 = vrot.slane %v323, 2
        %v325 = vmax.f32 %v323, %v324
        %v326 = vrot.slane %v325, 1
        %v327 = vmax.f32 %v325, %v326
        %v328 = vsel %vm303, %v301, -inf
        %v329 = vmax.f32 %v297, %v328
        %v330 = vrot.slane %v329, 4
        %v331 = vmax.f32 %v329, %v330
        %v332 = vrot.slane %v331, 2
        %v333 = vmax.f32 %v331, %v332
        %v334 = vrot.slane %v333, 1
        %v335 = vmax.f32 %v333, %v334
        %v336 = vsub.f32 %v294, %v311
        %v337 = vsub.f32 %v295, %v319
        %v338 = vsub.f32 %v296, %v327
        %v339 = vsub.f32 %v297, %v335
        %v340 = vsub.f32 %v298, %v311
        %v341 = vsub.f32 %v299, %v319
        %v342 = vsub.f32 %v300, %v327
        %v343 = vsub.f32 %v301, %v335
        %v344 = vmul.f32 %v336, 1.442695
        %v345 = vpow.pop %v344
        %v346 = vmul.f32 %v337, 1.442695
        %v347 = vpow.pop %v346
        %v348 = vmul.f32 %v338, 1.442695
        %v349 = vpow.pop %v348
        %v350 = vmul.f32 %v339, 1.442695
        %v351 = vpow.pop %v350
        %v352 = vmul.f32 %v340, 1.442695
        %v353 = vpow.pop %v352
        %v354 = vmul.f32 %v341, 1.442695
        %v355 = vpow.pop %v354
        %v356 = vmul.f32 %v342, 1.442695
        %v357 = vpow.pop %v356
        %v358 = vmul.f32 %v343, 1.442695
        %v359 = vpow.pop %v358
        %v360 = vsel %vm303, %v353, 0.0
        %v361 = vadd.f32 %v345, %v360
        %v362 = vrot.slane %v361, 4
        %v363 = vadd.f32 %v361, %v362
        %v364 = vrot.slane %v363, 2
        %v365 = vadd.f32 %v363, %v364
        %v366 = vrot.slane %v365, 1
        %v367 = vadd.f32 %v365, %v366
        %v368 = vsel %vm303, %v355, 0.0
        %v369 = vadd.f32 %v347, %v368
        %v370 = vrot.slane %v369, 4
        %v371 = vadd.f32 %v369, %v370
        %v372 = vrot.slane %v371, 2
        %v373 = vadd.f32 %v371, %v372
        %v374 = vrot.slane %v373, 1
        %v375 = vadd.f32 %v373, %v374
        %v376 = vsel %vm303, %v357, 0.0
        %v377 = vadd.f32 %v349, %v376
        %v378 = vrot.slane %v377, 4
        %v379 = vadd.f32 %v377, %v378
        %v380 = vrot.slane %v379, 2
        %v381 = vadd.f32 %v379, %v380
        %v382 = vrot.slane %v381, 1
        %v383 = vadd.f32 %v381, %v382
        %v384 = vsel %vm303, %v359, 0.0
        %v385 = vadd.f32 %v351, %v384
        %v386 = vrot.slane %v385, 4
        %v387 = vadd.f32 %v385, %v386
        %v388 = vrot.slane %v387, 2
        %v389 = vadd.f32 %v387, %v388
        %v390 = vrot.slane %v389, 1
        %v391 = vadd.f32 %v389, %v390
        %v392 = vrcp.pop %v367
        %v393 = vmul.f32 %v367, %v392
        %v394 = vsub.f32 1.0, %v393
        %v395 = vmul.f32 %v392, %v394
        %v396 = vadd.f32 %v392, %v395
        %vm397 = vweird.f32 %v367
        %vm398 = vweird.f32 %v392
        %vm399 = vmor %vm397, %vm398
        %v400 = vsel %vm399, %v392, %v396
        %v401 = vand.u32 2147483647, %v367
        %vm402 = vcmp.eq.f32.partialorder %v401, 8.507059e+37
        %v403 = vand.u32 %v367, 2147483648
        %v404 = vor.u32 1.1754944e-38, %v403
        %v405 = vsel %vm402, %v404, %v400
        %v406 = vmul.f32 1.0, %v405
        %v407 = vrcp.pop %v375
        %v408 = vmul.f32 %v375, %v407
        %v409 = vsub.f32 1.0, %v408
        %v410 = vmul.f32 %v407, %v409
        %v411 = vadd.f32 %v407, %v410
        %vm412 = vweird.f32 %v375
        %vm413 = vweird.f32 %v407
        %vm414 = vmor %vm412, %vm413
        %v415 = vsel %vm414, %v407, %v411
        %v416 = vand.u32 2147483647, %v375
        %vm417 = vcmp.eq.f32.partialorder %v416, 8.507059e+37
        %v418 = vand.u32 %v375, 2147483648
        %v419 = vor.u32 1.1754944e-38, %v418
        %v420 = vsel %vm417, %v419, %v415
        %v421 = vmul.f32 1.0, %v420
        %v422 = vrcp.pop %v383
        %v423 = vmul.f32 %v383, %v422
        %v424 = vsub.f32 1.0, %v423
        %v425 = vmul.f32 %v422, %v424
        %v426 = vadd.f32 %v422, %v425
        %vm427 = vweird.f32 %v383
        %vm428 = vweird.f32 %v422
        %vm429 = vmor %vm427, %vm428
        %v430 = vsel %vm429, %v422, %v426
        %v431 = vand.u32 2147483647, %v383
        %vm432 = vcmp.eq.f32.partialorder %v431, 8.507059e+37
        %v433 = vand.u32 %v383, 2147483648
        %v434 = vor.u32 1.1754944e-38, %v433
        %v435 = vsel %vm432, %v434, %v430
        %v436 = vmul.f32 1.0, %v435
        %v437 = vrcp.pop %v391
        %v438 = vmul.f32 %v391, %v437
        %v439 = vsub.f32 1.0, %v438
        %v440 = vmul.f32 %v437, %v439
        %v441 = vadd.f32 %v437, %v440
        %vm442 = vweird.f32 %v391
        %vm443 = vweird.f32 %v437
        %vm444 = vmor %vm442, %vm443
        %v445 = vsel %vm444, %v437, %v441
        %v446 = vand.u32 2147483647, %v391
        %vm447 = vcmp.eq.f32.partialorder %v446, 8.507059e+37
        %v448 = vand.u32 %v391, 2147483648
        %v449 = vor.u32 1.1754944e-38, %v448
        %v450 = vsel %vm447, %v449, %v445
        %v451 = vmul.f32 1.0, %v450
        %vm452 = vcmp.eq.f32.partialorder %v294, %v311
        %vm453 = vcmp.eq.f32.partialorder %v295, %v319
        %vm454 = vcmp.eq.f32.partialorder %v296, %v327
        %vm455 = vcmp.eq.f32.partialorder %v297, %v335
        %vm456 = vcmp.eq.f32.partialorder %v298, %v311
        %vm457 = vcmp.eq.f32.partialorder %v299, %v319
        %vm458 = vcmp.eq.f32.partialorder %v300, %v327
        %vm459 = vcmp.eq.f32.partialorder %v301, %v335
        %v460 = vsel %vm452, %v264, 10
        %v461 = vsel %vm453, %v264, 10
        %v462 = vsel %vm454, %v264, 10
        %v463 = vsel %vm455, %v264, 10
        %v464 = vsel %vm456, %v265, 10
        %v465 = vsel %vm457, %v265, 10
        %v466 = vsel %vm458, %v265, 10
        %v467 = vsel %vm459, %v265, 10
        %v468 = vsel %vm303, %v464, 2147483647
        %vm469 = vcmp.lt.s32.totalorder %v460, %v468
        %v470 = vsel %vm469, %v460, %v468
        %v471 = vrot.slane %v470, 4
        %vm472 = vcmp.lt.s32.totalorder %v470, %v471
        %v473 = vsel %vm472, %v470, %v471
        %v474 = vrot.slane %v473, 2
        %vm475 = vcmp.lt.s32.totalorder %v473, %v474
        %v476 = vsel %vm475, %v473, %v474
        %v477 = vrot.slane %v476, 1
        %vm478 = vcmp.lt.s32.totalorder %v476, %v477
        %v479 = vsel %vm478, %v476, %v477
        %v480 = vsel %vm303, %v465, 2147483647
        %vm481 = vcmp.lt.s32.totalorder %v461, %v480
        %v482 = vsel %vm481, %v461, %v480
        %v483 = vrot.slane %v482, 4
        %vm484 = vcmp.lt.s32.totalorder %v482, %v483
        %v485 = vsel %vm484, %v482, %v483
        %v486 = vrot.slane %v485, 2
        %vm487 = vcmp.lt.s32.totalorder %v485, %v486
        %v488 = vsel %vm487, %v485, %v486
        %v489 = vrot.slane %v488, 1
        %vm490 = vcmp.lt.s32.totalorder %v488, %v489
        %v491 = vsel %vm490, %v488, %v489
        %v492 = vsel %vm303, %v466, 2147483647
        %vm493 = vcmp.lt.s32.totalorder %v462, %v492
        %v494 = vsel %vm493, %v462, %v492
        %v495 = vrot.slane %v494, 4
        %vm496 = vcmp.lt.s32.totalorder %v494, %v495
        %v497 = vsel %vm496, %v494, %v495
        %v498 = vrot.slane %v497, 2
        %vm499 = vcmp.lt.s32.totalorder %v497, %v498
        %v500 = vsel %vm499, %v497, %v498
        %v501 = vrot.slane %v500, 1
        %vm502 = vcmp.lt.s32.totalorder %v500, %v501
        %v503 = vsel %vm502, %v500, %v501
        %v504 = vsel %vm303, %v467, 2147483647
        %vm505 = vcmp.lt.s32.totalorder %v463, %v504
        %v506 = vsel %vm505, %v463, %v504
        %v507 = vrot.slane %v506, 4
        %vm508 = vcmp.lt.s32.totalorder %v506, %v507
        %v509 = vsel %vm508, %v506, %v507
        %v510 = vrot.slane %v509, 2
        %vm511 = vcmp.lt.s32.totalorder %v509, %v510
        %v512 = vsel %vm511, %v509, %v510
        %v513 = vrot.slane %v512, 1
        %vm514 = vcmp.lt.s32.totalorder %v512, %v513
        %v515 = vsel %vm514, %v512, %v513
        %v516 = vperm.slane %v302, 0
        %v517 = vperm.slane %v302, 1
        %v518 = vperm.slane %v302, 2
        %v519 = vperm.slane %v302, 3
        %vm520 = vcmp.eq.s32.totalorder %v479, %v516
        %vm521 = vcmp.eq.s32.totalorder %v491, %v517
        %vm522 = vcmp.eq.s32.totalorder %v503, %v518
        %vm523 = vcmp.eq.s32.totalorder %v515, %v519
        %v524 = vsel %vm520, 1, 0
        %v525 = vsel %vm521, 1, 0
        %v526 = vsel %vm522, 1, 0
        %v527 = vsel %vm523, 1, 0
        %v528 = vcvt.s32.f32 %v524
        %v529 = vcvt.s32.f32 %v525
        %v530 = vcvt.s32.f32 %v526
        %v531 = vcvt.s32.f32 %v527
        %v532 = vstv %s288
        %v533 = vadd.s32 %v532, %v290
        %v534 = vadd.s32 %v532, %v291
        %v535 = vadd.s32 %v532, %v292
        %v536 = vadd.s32 %v532, %v293
        %vm537 = vcmp.lt.s32.totalorder %v533, 200
        %vm538 = vcmp.lt.s32.totalorder %v534, 200
        %vm539 = vcmp.lt.s32.totalorder %v535, 200
        %vm540 = vcmp.lt.s32.totalorder %v536, 200
        %v541 = vsel %vm537, %v406, 0.0
        %v542 = vsel %vm538, %v421, 0.0
        %v543 = vsel %vm539, %v436, 0.0
        %v544 = vsel %vm540, %v451, 0.0
        %vm545 = vcmp.gt.f32.partialorder %v406, %v279
        %vm546 = vcmp.gt.f32.partialorder %v421, %v279
        %vm547 = vcmp.gt.f32.partialorder %v436, %v279
        %vm548 = vcmp.gt.f32.partialorder %v451, %v279
        %vm549 = vcmp.gt.f32.partialorder %v406, %v280
        %vm550 = vcmp.gt.f32.partialorder %v421, %v280
        %vm551 = vcmp.gt.f32.partialorder %v436, %v280
        %vm552 = vcmp.gt.f32.partialorder %v451, %v280
        %vm553 = vcmp.le.f32.partialorder %v406, %v285
        %vm554 = vcmp.le.f32.partialorder %v421, %v285
        %vm555 = vcmp.le.f32.partialorder %v436, %v285
        %vm556 = vcmp.le.f32.partialorder %v451, %v285
        %vm557 = vcmp.le.f32.partialorder %v406, %v286
        %vm558 = vcmp.le.f32.partialorder %v421, %v286
        %vm559 = vcmp.le.f32.partialorder %v436, %v286
        %vm560 = vcmp.le.f32.partialorder %v451, %v286
        %vm561 = vmand %vm545, %vm553
        %vm562 = vmand %vm546, %vm554
        %vm563 = vmand %vm547, %vm555
        %vm564 = vmand %vm548, %vm556
        %vm565 = vmand %vm549, %vm557
        %vm566 = vmand %vm550, %vm558
        %vm567 = vmand %vm551, %vm559
        %vm568 = vmand %vm552, %vm560
        %v569 = vsel %vm537, 1, 0
        %v570 = vsel %vm538, 1, 0
        %v571 = vsel %vm539, 1, 0
        %v572 = vsel %vm540, 1, 0
        %vm573 = vcmp.eq.s32.totalorder %v569, 1
        %vm574 = vcmp.eq.s32.totalorder %v570, 1
        %vm575 = vcmp.eq.s32.totalorder %v571, 1
        %vm576 = vcmp.eq.s32.totalorder %v572, 1
        %vm577 = vmand %vm561, %vm573
        %vm578 = vmand %vm562, %vm574
        %vm579 = vmand %vm563, %vm575
        %vm580 = vmand %vm564, %vm576
        %vm581 = vmand %vm565, %vm573
        %vm582 = vmand %vm566, %vm574
        %vm583 = vmand %vm567, %vm575
        %vm584 = vmand %vm568, %vm576
        %v585 = vsel %vm577, 1, 0
        %v586 = vsel %vm578, 1, 0
        %v587 = vsel %vm579, 1, 0
        %v588 = vsel %vm580, 1, 0
        %v589 = vsel %vm581, 1, 0
        %v590 = vsel %vm582, 1, 0
        %v591 = vsel %vm583, 1, 0
        %v592 = vsel %vm584, 1, 0
        %v593 = vcvt.s32.f32 %v585
        %v594 = vcvt.s32.f32 %v586
        %v595 = vcvt.s32.f32 %v587
        %v596 = vcvt.s32.f32 %v588
        %v597 = vcvt.s32.f32 %v589
        %v598 = vcvt.s32.f32 %v590
        %v599 = vcvt.s32.f32 %v591
        %v600 = vcvt.s32.f32 %v592
        %v601 = vmul.f32 %v593, %v541
        %v602 = vmul.f32 %v594, %v542
        %v603 = vmul.f32 %v595, %v543
        %v604 = vmul.f32 %v596, %v544
        %v605 = vmul.f32 %v597, %v541
        %v606 = vmul.f32 %v598, %v542
        %v607 = vmul.f32 %v599, %v543
        %v608 = vmul.f32 %v600, %v544
        %v609 = vperm.slane %v528, 0
        %v610 = vperm.slane %v529, 0
        %v611 = vperm.slane %v530, 0
        %v612 = vperm.slane %v531, 0
        %v613 = vmul.f32 %v593, %v609
        %v614 = vmul.f32 %v594, %v610
        %v615 = vmul.f32 %v595, %v611
        %v616 = vmul.f32 %v596, %v612
        %v617 = vmul.f32 %v597, %v609
        %v618 = vmul.f32 %v598, %v610
        %v619 = vmul.f32 %v599, %v611
        %v620 = vmul.f32 %v600, %v612
        %v621 = vadd.f32 %v593, %v594
        %v622 = vadd.f32 %v597, %v598
        %v623 = vadd.f32 %v621, %v595
        %v624 = vadd.f32 %v622, %v599
        %v625 = vadd.f32 %v623, %v596
        %v626 = vadd.f32 %v624, %v600
        %v627 = vld [vmem:[%s241] sm:$0xff]
        %v628 = vld [vmem:[%s241 + $0x8] sm:$0xff]
        %v629 = vadd.f32 %v627, %v625
        %v630 = vadd.f32 %v628, %v626
        %631 = vst [vmem:[%s241] sm:$0xff] %v629
        %632 = vst [vmem:[%s241 + $0x8] sm:$0xff] %v630
        %v633 = vadd.f32 %v601, %v602
        %v634 = vadd.f32 %v605, %v606
        %v635 = vadd.f32 %v633, %v603
        %v636 = vadd.f32 %v634, %v607
        %v637 = vadd.f32 %v635, %v604
        %v638 = vadd.f32 %v636, %v608
        %s639 = scalar_lea.vmem %s241, 16 [#allocation7]
        %v640 = vld [vmem:[%s639] sm:$0xff]
        %v641 = vld [vmem:[%s639 + $0x8] sm:$0xff]
        %v642 = vadd.f32 %v640, %v637
        %v643 = vadd.f32 %v641, %v638
        %644 = vst [vmem:[%s639] sm:$0xff] %v642
        %645 = vst [vmem:[%s639 + $0x8] sm:$0xff] %v643
        %v646 = vadd.f32 %v613, %v614
        %v647 = vadd.f32 %v617, %v618
        %v648 = vadd.f32 %v646, %v615
        %v649 = vadd.f32 %v647, %v619
        %v650 = vadd.f32 %v648, %v616
        %v651 = vadd.f32 %v649, %v620
        %s652 = scalar_lea.vmem %s241, 32 [#allocation7]
        %v653 = vld [vmem:[%s652] sm:$0xff]
        %v654 = vld [vmem:[%s652 + $0x8] sm:$0xff]
        %v655 = vadd.f32 %v653, %v650
        %v656 = vadd.f32 %v654, %v651
        %657 = vst [vmem:[%s652] sm:$0xff] %v655
        %658 = vst [vmem:[%s652 + $0x8] sm:$0xff] %v656
        %s659 = sand.u32 %s106, 1
        %s660 = scalar_lea.sflag [#allocation4], %s659
        %s661 = sand.u32 %s106, 1
        %s662 = smul.addr %s661, 48
        %s663 = scalar_lea.vmem [#allocation7], %s662
        // Predicated region
        $region41: #{tpu_custom_call.1} parent=27 // pred_check
          %p664 = pneg %p116
        $region42: #{tpu_custom_call.1} parent=27 // pred_check_branch
          %666 = sbr.rel (%p664) target = $region44
        $region43: #{tpu_custom_call.1} parent=27 // pred_region
          %668 = vsyncadd %s660, 0
          %s669 = smul.addr %s26, 6
          %s670 = smul.addr %s669, 8
          %s671 = scalar_lea.hbm %s2, %s670
          %s672 = sshll.u32 %s663, 4
          %s673 = int_to_ptr.vmem [resolvable:$true] %s672
          %s674 = sshll.u32 %s671, 4
          %s675 = int_to_ptr.hbm [resolvable:$true] %s674
          %680 = dma.vmem_to_hbm [thread:$0]  %s673, 768, %s675, %s660, 128, 128, 8
        $region44: #{tpu_custom_call.1} parent=27 // pred_fallthru
          _
      $region28: #{tpu_custom_call.1} parent=5 // pred_fallthru
        _
      %p681 = scmp.le.s32.totalorder 2, %s17
      // Predicated region
      $region45: #{tpu_custom_call.1} parent=5 // pred_check
        %p682 = pneg %p681
      $region46: #{tpu_custom_call.1} parent=5 // pred_check_branch
        %684 = sbr.rel (%p682) target = $region48
      $region47: #{tpu_custom_call.1} parent=5 // pred_region
        %s685 = ssub.s32 %s17, 2
        // Predicated region
        $region49: #{tpu_custom_call.1} parent=47 // pred_check
          %p686 = pneg %p122
        $region50: #{tpu_custom_call.1} parent=47 // pred_check_branch
          %688 = sbr.rel (%p686) target = $region52
        $region51: #{tpu_custom_call.1} parent=47 // pred_region
          %s689 = sand.u32 %s107, 1
          %s690 = scalar_lea.sflag [#allocation4], %s689
          %s691 = sand.u32 %s107, 1
          %s692 = smul.addr %s691, 48
          %s693 = scalar_lea.vmem [#allocation7], %s692
          %695 = dma.done %s690, 768
        $region52: #{tpu_custom_call.1} parent=47 // pred_fallthru
          _
      $region48: #{tpu_custom_call.1} parent=5 // pred_fallthru
        _
    $region6: #{tpu_custom_call.1} parent=1 // loop_footer
      %s21 = sadd.s32 1, %s17
    $region7: #{tpu_custom_call.1} parent=1 // loop_footer_branch
      %16 = sbr.rel target = $region3
    $region8: #{tpu_custom_call.1} parent=1 // loop_exit
      _
    %696 = vsyncpa [#allocation3], 1
    %s697 = scalar_lea.sflag [#allocation3], 1
    %698 = vsyncpa %s697, 1
    %699 = vsyncpa [#allocation6], 1
    %s700 = scalar_lea.sflag [#allocation6], 1
    %701 = vsyncpa %s700, 1
    %702 = vsyncpa [#allocation4], 1
    %s703 = scalar_lea.sflag [#allocation4], 1
    %704 = vsyncpa %s703, 1

</llo_original>
